<compile_context>
chip_gen: v7x
topology: tpu7x:2x2x1
jax: 0.10.0
libtpu: 0.0.40
codegen_flags: <defaults>
</compile_context>

<pallas_src>
import functools

import numpy as np
import jax
import jax.numpy as jnp
from jax.experimental import pallas as pl
from jax.experimental.pallas import tpu as pltpu


# ---------------------------------------------------------------------------
# Exact linear operators (host-side, cached) for adaptive pool / bilinear up
# ---------------------------------------------------------------------------
@functools.lru_cache(maxsize=None)
def _adaptive_pool_matrix(H, W, p):
    """P[h*W+w, i*p+j] so pooled = x_flat @ P == AdaptiveAvgPool2d(p)."""
    P = np.zeros((H * W, p * p), dtype=np.float32)
    for i in range(p):
        hs = (i * H) // p
        he = -(-((i + 1) * H) // p)          # ceil
        for j in range(p):
            ws = (j * W) // p
            we = -(-((j + 1) * W) // p)      # ceil
            cnt = float((he - hs) * (we - ws))
            for h in range(hs, he):
                for w in range(ws, we):
                    P[h * W + w, i * p + j] = 1.0 / cnt
    return P


@functools.lru_cache(maxsize=None)
def _bilinear_matrix(p, Ho, Wo):
    """U[iy*p+ix, oy*Wo+ox] so up = small @ U == bilinear, align_corners=True."""
    U = np.zeros((p * p, Ho * Wo), dtype=np.float32)
    for oy in range(Ho):
        sy = 0.0 if (Ho == 1 or p == 1) else oy * (p - 1) / (Ho - 1)
        y0 = int(np.floor(sy)); y1 = min(y0 + 1, p - 1); wy = sy - y0
        for ox in range(Wo):
            sx = 0.0 if (Wo == 1 or p == 1) else ox * (p - 1) / (Wo - 1)
            x0 = int(np.floor(sx)); x1 = min(x0 + 1, p - 1); wx = sx - x0
            o = oy * Wo + ox
            U[y0 * p + x0, o] += (1.0 - wy) * (1.0 - wx)
            U[y0 * p + x1, o] += (1.0 - wy) * wx
            U[y1 * p + x0, o] += wy * (1.0 - wx)
            U[y1 * p + x1, o] += wy * wx
    return U


@functools.lru_cache(maxsize=None)
def _build_operators(H, W, pool_sizes, height, width):
    """Concatenated bf16 pool / upsample operators for all p>1 branches."""
    pmats, umats = [], []
    for p in pool_sizes:
        if p > 1:
            pmats.append(_adaptive_pool_matrix(H, W, p))
            umats.append(_bilinear_matrix(p, height, width))
    pmat = jnp.asarray(np.concatenate(pmats, axis=1), dtype=jnp.bfloat16)
    umat = jnp.asarray(np.concatenate(umats, axis=0), dtype=jnp.bfloat16)
    return pmat, umat


# ---------------------------------------------------------------------------
# Fused Pallas kernel: identity + all pyramid branches, one batch elem / step
# ---------------------------------------------------------------------------
def _pyramid_kernel(x_ref, pmat_ref, umat_ref, w_ref, shift_ref, o_ref,
                    *, pool_sizes, C, OC, HWo):
    x = x_ref[0]                                           # (C, HW) f32

    # Identity branch: exact f32 copy into channels [0, C) of the concat.
    o_ref[0, 0:C, :] = x

    # Fused adaptive average pool for every p>1 branch (bf16 MXU, f32 acc).
    xb = x.astype(jnp.bfloat16)
    pooled = jnp.dot(xb, pmat_ref[...],
                     preferred_element_type=jnp.float32)   # (C, sum p^2)
    pooled_b = pooled.astype(jnp.bfloat16)

    off = 0
    for b, p in enumerate(pool_sizes):
        w_b = w_ref[b]                                     # (OC, C) bf16, BN scale folded
        shift_b = shift_ref[b]                             # (OC, 1) f32
        c0 = C + b * OC
        if p == 1:
            # AdaptiveAvgPool2d(1) == global mean (XLU); 1x1->HxW bilinear
            # upsample (align_corners) == constant lane-broadcast.
            mean_x = jnp.mean(x, axis=1, keepdims=True)                     # (C, 1)
            conv = jnp.dot(w_b.astype(jnp.float32), mean_x,
                           preferred_element_type=jnp.float32)              # (OC, 1)
            act = jnp.maximum(conv + shift_b, 0.0)
            o_ref[0, c0:c0 + OC, :] = jnp.broadcast_to(
                act, (OC, HWo)).astype(o_ref.dtype)
        else:
            p2 = p * p
            conv = jnp.dot(w_b, pooled_b[:, off:off + p2],
                           preferred_element_type=jnp.float32)              # (OC, p2)
            act = jnp.maximum(conv + shift_b, 0.0)          # folded BN shift + ReLU (f32)
            up = jnp.dot(act.astype(jnp.bfloat16), umat_ref[off:off + p2, :],
                         preferred_element_type=jnp.float32)                # (OC, HWo)
            o_ref[0, c0:c0 + OC, :] = up.astype(o_ref.dtype)
            off += p2


# ---------------------------------------------------------------------------
# Parameter prep (done once) + forward wrapper
# ---------------------------------------------------------------------------
def prepare_pyramid_params(raw_params, pool_sizes, H, W, height, width, eps=1e-5):
    """Fold BN (running-stats / inference semantics) into the 1x1 conv weights,
    stack per-branch tensors, and build cached pool/upsample operators."""
    w_list, shift_list = [], []
    for prm in raw_params:
        inv_std = 1.0 / jnp.sqrt(prm["running_var"] + eps)
        scale = prm["gamma"] * inv_std                                   # (OC,)
        w_list.append((prm["weight"] * scale[:, None]).astype(jnp.bfloat16))
        shift_list.append((prm["beta"] - prm["running_mean"] * scale)[:, None])
    pmat, umat = _build_operators(H, W, tuple(pool_sizes), height, width)
    return {
        "pool_sizes": tuple(pool_sizes),
        "height": height,
        "width": width,
        "pmat": pmat,                                                    # (HW, sum p^2) bf16
        "umat": umat,                                                    # (sum p^2, HWo) bf16
        "w": jnp.stack(w_list, axis=0),                                  # (nb, OC, C) bf16
        "shift": jnp.stack(shift_list, axis=0).astype(jnp.float32),      # (nb, OC, 1) f32
    }


def pyramid_pooling_forward(x, prepared):
    """x: (N, C, H, W) float32 -> (N, C + nb*OC, height, width) float32."""
    N, C, H, W = x.shape
    pool_sizes = prepared["pool_sizes"]
    height, width = prepared["height"], prepared["width"]
    HW, HWo = H * W, height * width
    assert HW == HWo, "torch.cat(dim=1) requires matching spatial sizes"
    nb = len(pool_sizes)
    OC = prepared["w"].shape[1]
    C_total = C + nb * OC
    P2 = prepared["pmat"].shape[1]

    kernel = functools.partial(_pyramid_kernel, pool_sizes=pool_sizes,
                               C=C, OC=OC, HWo=HWo)

    out = pl.pallas_call(
        kernel,
        out_shape=jax.ShapeDtypeStruct((N, C_total, HWo), jnp.float32),
        grid_spec=pltpu.PrefetchScalarGridSpec(
            num_scalar_prefetch=0,
            grid=(N,),
            in_specs=[
                pl.BlockSpec((1, C, HW), lambda n: (n, 0, 0)),     # x (read once)
                pl.BlockSpec((HW, P2), lambda n: (0, 0)),          # fused pool operator
                pl.BlockSpec((P2, HWo), lambda n: (0, 0)),         # fused upsample operator
                pl.BlockSpec((nb, OC, C), lambda n: (0, 0, 0)),    # folded conv weights
                pl.BlockSpec((nb, OC, 1), lambda n: (0, 0, 0)),    # BN shift
            ],
            out_specs=pl.BlockSpec((1, C_total, HWo), lambda n: (n, 0, 0)),
        ),
        compiler_params=pltpu.CompilerParams(dimension_semantics=("parallel",)),
    )(x.reshape(N, C, HW), prepared["pmat"], prepared["umat"],
      prepared["w"], prepared["shift"])
    return out.reshape(N, C_total, height, width)


# ---------------------------------------------------------------------------
# Pure-JAX f32 reference (semantics check) + deterministic params
# ---------------------------------------------------------------------------
def _reference_forward(x, raw_params, pool_sizes, height, width, eps=1e-5):
    N, C, H, W = x.shape
    outs = [x]
    for p, prm in zip(pool_sizes, raw_params):
        P = jnp.asarray(_adaptive_pool_matrix(H, W, p))
        U = jnp.asarray(_bilinear_matrix(p, height, width))
        pooled = x.reshape(N, C, H * W) @ P                              # (N, C, p^2)
        conv = jnp.einsum("oc,ncp->nop", prm["weight"], pooled)
        inv_std = 1.0 / jnp.sqrt(prm["running_var"] + eps)
        scale = (prm["gamma"] * inv_std)[None, :, None]
        shift = (prm["beta"] - prm["running_mean"] * prm["gamma"] * inv_std)[None, :, None]
        act = jnp.maximum(conv * scale + shift, 0.0)
        up = act @ U                                                     # (N, OC, HWo)
        outs.append(up.reshape(N, -1, height, width))
    return jnp.concatenate(outs, axis=1)


def _init_params(key, in_channels, pool_sizes):
    out_channels = in_channels // len(pool_sizes)
    params = []
    for _ in pool_sizes:
        k_w, k_g, k_b, k_m, k_v, key = jax.random.split(key, 6)
        params.append({
            # Conv2d(in, out, k=1, bias=False) weight -> squeezed to (OC, C)
            "weight": jax.random.normal(k_w, (out_channels, in_channels), jnp.float32) * 0.1,
            "gamma": 1.0 + 0.1 * jax.random.normal(k_g, (out_channels,), jnp.float32),
            "beta": 0.1 * jax.random.normal(k_b, (out_channels,), jnp.float32),
            "running_mean": 0.1 * jax.random.normal(k_m, (out_channels,), jnp.float32),
            "running_var": 1.0 + 0.1 * jnp.abs(jax.random.normal(k_v, (out_channels,), jnp.float32)),
        })
    return params


if __name__ == "__main__":
    key = jax.random.PRNGKey(0)
    N, C, H, W = 2, 4, 16, 16
    pool_sizes = (6, 3, 2, 1)
    height, width = H, W

    k_x, k_p = jax.random.split(key)
    x = jax.random.normal(k_x, (N, C, H, W), jnp.float32)
    raw_params = _init_params(k_p, C, pool_sizes)

    prepared = prepare_pyramid_params(raw_params, pool_sizes, H, W, height, width)
    out = pyramid_pooling_forward(x, prepared)
    out = jax.block_until_ready(out)

    expected_channels = C + len(pool_sizes) * (C // len(pool_sizes))
    assert out.shape == (N, expected_channels, height, width), out.shape

    # Semantics check against the exact f32 reference (bf16 matmul operands in
    # the kernel -> generous tolerance; identity channels are bit-exact).
    ref = _reference_forward(x, raw_params, pool_sizes, height, width)
    np.testing.assert_allclose(np.asarray(out), np.asarray(ref), atol=5e-2, rtol=5e-2)

    print("KERNEL_OK")
</pallas_src>

<mosaic_0001>
module attributes {stable_mosaic.version = 11 : i64} {
  func.func @_pyramid_kernel(%arg0: i32, %arg1: memref<1x4x256xf32, #tpu.memory_space<vmem>>, %arg2: memref<256x49xbf16, #tpu.memory_space<vmem>>, %arg3: memref<49x256xbf16, #tpu.memory_space<vmem>>, %arg4: memref<4x1x4xbf16, #tpu.memory_space<vmem>>, %arg5: memref<4x1x1xf32, #tpu.memory_space<vmem>>, %arg6: memref<1x8x256xf32, #tpu.memory_space<vmem>>) attributes {dimension_semantics = [#tpu.dimension_semantics<parallel>], iteration_bounds = array<i64: 2>, scalar_prefetch = 0 : i64, scratch_operands = 0 : i64, tpu.core_type = #tpu.core_type<tc>, window_params = [{transform_indices = @transform_0, window_bounds = array<i64: 1, 4, 256>}, {pipeline_mode = #tpu.pipeline_mode<synchronous>, transform_indices = @transform_1, window_bounds = array<i64: 256, 49>}, {pipeline_mode = #tpu.pipeline_mode<synchronous>, transform_indices = @transform_2, window_bounds = array<i64: 49, 256>}, {pipeline_mode = #tpu.pipeline_mode<synchronous>, transform_indices = @transform_3, window_bounds = array<i64: 4, 1, 4>}, {pipeline_mode = #tpu.pipeline_mode<synchronous>, transform_indices = @transform_4, window_bounds = array<i64: 4, 1, 1>}, {transform_indices = @transform_5, window_bounds = array<i64: 1, 8, 256>}]} {
    %c0 = arith.constant 0 : index
    %c0_0 = arith.constant 0 : index
    %c0_1 = arith.constant 0 : index
    %0 = vector.load %arg1[%c0, %c0_0, %c0_1] : memref<1x4x256xf32, #tpu.memory_space<vmem>>, vector<1x4x256xf32>
    %1 = vector.shape_cast %0 : vector<1x4x256xf32> to vector<4x256xf32>
    %c0_2 = arith.constant 0 : index
    %c0_3 = arith.constant 0 : index
    %c0_4 = arith.constant 0 : index
    %2 = vector.load %arg6[%c0_2, %c0_3, %c0_4] : memref<1x8x256xf32, #tpu.memory_space<vmem>>, vector<1x4x256xf32>
    %3 = vector.shape_cast %2 : vector<1x4x256xf32> to vector<4x256xf32>
    %4 = vector.shape_cast %1 : vector<4x256xf32> to vector<1x4x256xf32>
    tpu.vector_store %arg6[%c0_2, %c0_3, %c0_4], %4 {strides = array<i32>} : memref<1x8x256xf32, #tpu.memory_space<vmem>>, vector<1x4x256xf32>,
    %5 = arith.truncf %1 : vector<4x256xf32> to vector<4x256xbf16>
    %c0_5 = arith.constant 0 : index
    %c0_6 = arith.constant 0 : index
    %6 = vector.load %arg2[%c0_5, %c0_6] : memref<256x49xbf16, #tpu.memory_space<vmem>>, vector<256x49xbf16>
    %cst = arith.constant dense<0.000000e+00> : vector<4x49xf32>
    %7 = tpu.matmul %5, %6, %cst {dimension_numbers = #tpu.dot_dimension_numbers<[1], [0], [0], [1], [0, 0, 1, 1], [], []>} : vector<4x256xbf16>, vector<256x49xbf16>, vector<4x49xf32> -> vector<4x49xf32>
    %8 = arith.truncf %7 : vector<4x49xf32> to vector<4x49xbf16>
    %c0_7 = arith.constant 0 : index
    %c0_8 = arith.constant 0 : index
    %c0_9 = arith.constant 0 : index
    %9 = vector.load %arg4[%c0_7, %c0_8, %c0_9] : memref<4x1x4xbf16, #tpu.memory_space<vmem>>, vector<1x1x4xbf16>
    %10 = vector.shape_cast %9 : vector<1x1x4xbf16> to vector<1x4xbf16>
    %c0_10 = arith.constant 0 : index
    %c0_11 = arith.constant 0 : index
    %c0_12 = arith.constant 0 : index
    %11 = vector.load %arg5[%c0_10, %c0_11, %c0_12] : memref<4x1x1xf32, #tpu.memory_space<vmem>>, vector<1x1x1xf32>
    %12 = vector.shape_cast %11 : vector<1x1x1xf32> to vector<1x1xf32>
    %13 = vector.extract_strided_slice %8 {offsets = [0, 0], sizes = [4, 36], strides = [1, 1]} : vector<4x49xbf16> to vector<4x36xbf16>
    %cst_13 = arith.constant dense<0.000000e+00> : vector<1x36xf32>
    %14 = tpu.matmul %10, %13, %cst_13 {dimension_numbers = #tpu.dot_dimension_numbers<[1], [0], [0], [1], [0, 0, 1, 1], [], []>} : vector<1x4xbf16>, vector<4x36xbf16>, vector<1x36xf32> -> vector<1x36xf32>
    %15 = vector.broadcast %12 : vector<1x1xf32> to vector<1x36xf32>
    %16 = arith.addf %14, %15 : vector<1x36xf32>
    %cst_14 = arith.constant 0.000000e+00 : f32
    %17 = vector.broadcast %cst_14 : f32 to vector<1x36xf32>
    %18 = arith.maximumf %16, %17 : vector<1x36xf32>
    %19 = arith.truncf %18 : vector<1x36xf32> to vector<1x36xbf16>
    %c0_15 = arith.constant 0 : index
    %c0_16 = arith.constant 0 : index
    %20 = vector.load %arg3[%c0_15, %c0_16] : memref<49x256xbf16, #tpu.memory_space<vmem>>, vector<36x256xbf16>
    %cst_17 = arith.constant dense<0.000000e+00> : vector<1x256xf32>
    %21 = tpu.matmul %19, %20, %cst_17 {dimension_numbers = #tpu.dot_dimension_numbers<[1], [0], [0], [1], [0, 0, 1, 1], [], []>} : vector<1x36xbf16>, vector<36x256xbf16>, vector<1x256xf32> -> vector<1x256xf32>
    %c0_18 = arith.constant 0 : index
    %c4 = arith.constant 4 : index
    %c0_19 = arith.constant 0 : index
    %22 = vector.load %arg6[%c0_18, %c4, %c0_19] : memref<1x8x256xf32, #tpu.memory_space<vmem>>, vector<1x1x256xf32>
    %23 = vector.shape_cast %22 : vector<1x1x256xf32> to vector<1x256xf32>
    %24 = vector.shape_cast %21 : vector<1x256xf32> to vector<1x1x256xf32>
    tpu.vector_store %arg6[%c0_18, %c4, %c0_19], %24 {strides = array<i32>} : memref<1x8x256xf32, #tpu.memory_space<vmem>>, vector<1x1x256xf32>,
    %c1 = arith.constant 1 : index
    %c0_20 = arith.constant 0 : index
    %c0_21 = arith.constant 0 : index
    %25 = vector.load %arg4[%c1, %c0_20, %c0_21] : memref<4x1x4xbf16, #tpu.memory_space<vmem>>, vector<1x1x4xbf16>
    %26 = vector.shape_cast %25 : vector<1x1x4xbf16> to vector<1x4xbf16>
    %c1_22 = arith.constant 1 : index
    %c0_23 = arith.constant 0 : index
    %c0_24 = arith.constant 0 : index
    %27 = vector.load %arg5[%c1_22, %c0_23, %c0_24] : memref<4x1x1xf32, #tpu.memory_space<vmem>>, vector<1x1x1xf32>
    %28 = vector.shape_cast %27 : vector<1x1x1xf32> to vector<1x1xf32>
    %29 = vector.extract_strided_slice %8 {offsets = [0, 36], sizes = [4, 9], strides = [1, 1]} : vector<4x49xbf16> to vector<4x9xbf16>
    %cst_25 = arith.constant dense<0.000000e+00> : vector<1x9xf32>
    %30 = tpu.matmul %26, %29, %cst_25 {dimension_numbers = #tpu.dot_dimension_numbers<[1], [0], [0], [1], [0, 0, 1, 1], [], []>} : vector<1x4xbf16>, vector<4x9xbf16>, vector<1x9xf32> -> vector<1x9xf32>
    %31 = vector.broadcast %28 : vector<1x1xf32> to vector<1x9xf32>
    %32 = arith.addf %30, %31 : vector<1x9xf32>
    %cst_26 = arith.constant 0.000000e+00 : f32
    %33 = vector.broadcast %cst_26 : f32 to vector<1x9xf32>
    %34 = arith.maximumf %32, %33 : vector<1x9xf32>
    %35 = arith.truncf %34 : vector<1x9xf32> to vector<1x9xbf16>
    %c36 = arith.constant 36 : index
    %c0_27 = arith.constant 0 : index
    %36 = vector.load %arg3[%c36, %c0_27] : memref<49x256xbf16, #tpu.memory_space<vmem>>, vector<9x256xbf16>
    %cst_28 = arith.constant dense<0.000000e+00> : vector<1x256xf32>
    %37 = tpu.matmul %35, %36, %cst_28 {dimension_numbers = #tpu.dot_dimension_numbers<[1], [0], [0], [1], [0, 0, 1, 1], [], []>} : vector<1x9xbf16>, vector<9x256xbf16>, vector<1x256xf32> -> vector<1x256xf32>
    %c0_29 = arith.constant 0 : index
    %c5 = arith.constant 5 : index
    %c0_30 = arith.constant 0 : index
    %38 = vector.load %arg6[%c0_29, %c5, %c0_30] : memref<1x8x256xf32, #tpu.memory_space<vmem>>, vector<1x1x256xf32>
    %39 = vector.shape_cast %38 : vector<1x1x256xf32> to vector<1x256xf32>
    %40 = vector.shape_cast %37 : vector<1x256xf32> to vector<1x1x256xf32>
    tpu.vector_store %arg6[%c0_29, %c5, %c0_30], %40 {strides = array<i32>} : memref<1x8x256xf32, #tpu.memory_space<vmem>>, vector<1x1x256xf32>,
    %c2 = arith.constant 2 : index
    %c0_31 = arith.constant 0 : index
    %c0_32 = arith.constant 0 : index
    %41 = vector.load %arg4[%c2, %c0_31, %c0_32] : memref<4x1x4xbf16, #tpu.memory_space<vmem>>, vector<1x1x4xbf16>
    %42 = vector.shape_cast %41 : vector<1x1x4xbf16> to vector<1x4xbf16>
    %c2_33 = arith.constant 2 : index
    %c0_34 = arith.constant 0 : index
    %c0_35 = arith.constant 0 : index
    %43 = vector.load %arg5[%c2_33, %c0_34, %c0_35] : memref<4x1x1xf32, #tpu.memory_space<vmem>>, vector<1x1x1xf32>
    %44 = vector.shape_cast %43 : vector<1x1x1xf32> to vector<1x1xf32>
    %45 = vector.extract_strided_slice %8 {offsets = [0, 45], sizes = [4, 4], strides = [1, 1]} : vector<4x49xbf16> to vector<4x4xbf16>
    %cst_36 = arith.constant dense<0.000000e+00> : vector<1x4xf32>
    %46 = tpu.matmul %42, %45, %cst_36 {dimension_numbers = #tpu.dot_dimension_numbers<[1], [0], [0], [1], [0, 0, 1, 1], [], []>} : vector<1x4xbf16>, vector<4x4xbf16>, vector<1x4xf32> -> vector<1x4xf32>
    %47 = vector.broadcast %44 : vector<1x1xf32> to vector<1x4xf32>
    %48 = arith.addf %46, %47 : vector<1x4xf32>
    %cst_37 = arith.constant 0.000000e+00 : f32
    %49 = vector.broadcast %cst_37 : f32 to vector<1x4xf32>
    %50 = arith.maximumf %48, %49 : vector<1x4xf32>
    %51 = arith.truncf %50 : vector<1x4xf32> to vector<1x4xbf16>
    %c45 = arith.constant 45 : index
    %c0_38 = arith.constant 0 : index
    %52 = vector.load %arg3[%c45, %c0_38] : memref<49x256xbf16, #tpu.memory_space<vmem>>, vector<4x256xbf16>
    %cst_39 = arith.constant dense<0.000000e+00> : vector<1x256xf32>
    %53 = tpu.matmul %51, %52, %cst_39 {dimension_numbers = #tpu.dot_dimension_numbers<[1], [0], [0], [1], [0, 0, 1, 1], [], []>} : vector<1x4xbf16>, vector<4x256xbf16>, vector<1x256xf32> -> vector<1x256xf32>
    %c0_40 = arith.constant 0 : index
    %c6 = arith.constant 6 : index
    %c0_41 = arith.constant 0 : index
    %54 = vector.load %arg6[%c0_40, %c6, %c0_41] : memref<1x8x256xf32, #tpu.memory_space<vmem>>, vector<1x1x256xf32>
    %55 = vector.shape_cast %54 : vector<1x1x256xf32> to vector<1x256xf32>
    %56 = vector.shape_cast %53 : vector<1x256xf32> to vector<1x1x256xf32>
    tpu.vector_store %arg6[%c0_40, %c6, %c0_41], %56 {strides = array<i32>} : memref<1x8x256xf32, #tpu.memory_space<vmem>>, vector<1x1x256xf32>,
    %c3 = arith.constant 3 : index
    %c0_42 = arith.constant 0 : index
    %c0_43 = arith.constant 0 : index
    %57 = vector.load %arg4[%c3, %c0_42, %c0_43] : memref<4x1x4xbf16, #tpu.memory_space<vmem>>, vector<1x1x4xbf16>
    %58 = vector.shape_cast %57 : vector<1x1x4xbf16> to vector<1x4xbf16>
    %c3_44 = arith.constant 3 : index
    %c0_45 = arith.constant 0 : index
    %c0_46 = arith.constant 0 : index
    %59 = vector.load %arg5[%c3_44, %c0_45, %c0_46] : memref<4x1x1xf32, #tpu.memory_space<vmem>>, vector<1x1x1xf32>
    %60 = vector.shape_cast %59 : vector<1x1x1xf32> to vector<1x1xf32>
    %cst_47 = arith.constant dense<0.000000e+00> : vector<4xf32>
    %61 = vector.multi_reduction <add>, %1, %cst_47 [1] : vector<4x256xf32> to vector<4xf32>
    %62 = vector.shape_cast %61 : vector<4xf32> to vector<4x1xf32>
    %cst_48 = arith.constant 2.560000e+02 : f32
    %63 = vector.broadcast %cst_48 : f32 to vector<4x1xf32>
    %64 = arith.divf %62, %63 : vector<4x1xf32>
    %65 = arith.extf %58 : vector<1x4xbf16> to vector<1x4xf32>
    %cst_49 = arith.constant dense<0.000000e+00> : vector<1x1xf32>
    %66 = tpu.matmul %65, %64, %cst_49 {dimension_numbers = #tpu.dot_dimension_numbers<[1], [0], [0], [1], [0, 0, 1, 1], [], []>} : vector<1x4xf32>, vector<4x1xf32>, vector<1x1xf32> -> vector<1x1xf32>
    %67 = arith.addf %66, %60 : vector<1x1xf32>
    %cst_50 = arith.constant 0.000000e+00 : f32
    %68 = vector.broadcast %cst_50 : f32 to vector<1x1xf32>
    %69 = arith.maximumf %67, %68 : vector<1x1xf32>
    %70 = vector.shape_cast %69 : vector<1x1xf32> to vector<1x1xf32>
    %71 = vector.broadcast %70 : vector<1x1xf32> to vector<1x256xf32>
    %c0_51 = arith.constant 0 : index
    %c7 = arith.constant 7 : index
    %c0_52 = arith.constant 0 : index
    %72 = vector.load %arg6[%c0_51, %c7, %c0_52] : memref<1x8x256xf32, #tpu.memory_space<vmem>>, vector<1x1x256xf32>
    %73 = vector.shape_cast %72 : vector<1x1x256xf32> to vector<1x256xf32>
    %74 = vector.shape_cast %71 : vector<1x256xf32> to vector<1x1x256xf32>
    tpu.vector_store %arg6[%c0_51, %c7, %c0_52], %74 {strides = array<i32>} : memref<1x8x256xf32, #tpu.memory_space<vmem>>, vector<1x1x256xf32>,
    return
  }
  func.func @transform_0(%arg0: i32) -> (i32, i32, i32) {
    %c0_i32 = arith.constant 0 : i32
    %c0_i32_0 = arith.constant 0 : i32
    %c0_i32_1 = arith.constant 0 : i32
    return %arg0, %c0_i32, %c0_i32_0 : i32, i32, i32
  }
  func.func @transform_1(%arg0: i32) -> (i32, i32) {
    %c0_i32 = arith.constant 0 : i32
    %c0_i32_0 = arith.constant 0 : i32
    %c0_i32_1 = arith.constant 0 : i32
    return %c0_i32, %c0_i32_0 : i32, i32
  }
  func.func @transform_2(%arg0: i32) -> (i32, i32) {
    %c0_i32 = arith.constant 0 : i32
    %c0_i32_0 = arith.constant 0 : i32
    %c0_i32_1 = arith.constant 0 : i32
    return %c0_i32, %c0_i32_0 : i32, i32
  }
  func.func @transform_3(%arg0: i32) -> (i32, i32, i32) {
    %c0_i32 = arith.constant 0 : i32
    %c0_i32_0 = arith.constant 0 : i32
    %c0_i32_1 = arith.constant 0 : i32
    %c0_i32_2 = arith.constant 0 : i32
    return %c0_i32, %c0_i32_0, %c0_i32_1 : i32, i32, i32
  }
  func.func @transform_4(%arg0: i32) -> (i32, i32, i32) {
    %c0_i32 = arith.constant 0 : i32
    %c0_i32_0 = arith.constant 0 : i32
    %c0_i32_1 = arith.constant 0 : i32
    %c0_i32_2 = arith.constant 0 : i32
    return %c0_i32, %c0_i32_0, %c0_i32_1 : i32, i32, i32
  }
  func.func @transform_5(%arg0: i32) -> (i32, i32, i32) {
    %c0_i32 = arith.constant 0 : i32
    %c0_i32_0 = arith.constant 0 : i32
    %c0_i32_1 = arith.constant 0 : i32
    return %arg0, %c0_i32, %c0_i32_0 : i32, i32, i32
  }
}

</mosaic_0001>

<llo_original>
// kernel: tpu_custom_call.1
$region0: #{tpu_custom_call.1}
  #allocation0 [shape = 'u32[]', space=smem, size = 0x4, offset = 0x4, fixed_abs, tag = 'smem constant byte address 0x4 - core index']
  #allocation1 [shape = 'u32[144,128]{1,0:T(1,128)}', space=vmem, size = 0x12000, scoped, tag = 'internal scratch']
  %s0 = inlined_call_operand.vmem [shape: f32[2,4,256], index: 0, kind: input, shape index: {}]
  %s1 = inlined_call_operand.vmem [shape: bf16[256,49], index: 1, kind: input, shape index: {}]
  %s2 = inlined_call_operand.vmem [shape: bf16[49,256], index: 2, kind: input, shape index: {}]
  %s3 = inlined_call_operand.vmem [shape: bf16[4,1,4], index: 3, kind: input, shape index: {}]
  %s4 = inlined_call_operand.vmem [shape: f32[4,1,1], index: 4, kind: input, shape index: {}]
  %s5 = inlined_call_operand.hbm [shape: f32[2,8,256], index: 5, kind: output, shape index: {}]
  %s6 = sld [smem:[#allocation0]]
  $region53: #{tpu_custom_call.1} parent=0
    _
  %s8 = ssub.s32 1, %s6
  %s9 = scalar_select 0, %s8, %s6
  $region1: #{tpu_custom_call.1} parent=0
    #allocation2 [shape = 'u8[16384]{0}', space=vmem, size = 0x4000, scoped, tag = 'output window, operand 0']
    #allocation3 [shape = 's32[2]{0}', space=sflag, size = 0x8, scoped, tag = 'scoped memory for tpu_custom_call.1']
    %10 = vsyncpa [#allocation3], 0
    %s11 = scalar_lea.sflag [#allocation3], 1
    %12 = vsyncpa %s11, 0
    loop: start=0, step=1, limit=4
    $region2: #{tpu_custom_call.1} parent=1 // loop_pre_header
      _
    $region3: #{tpu_custom_call.1} parent=1 // loop_header
      %s14 = sphi 0, %s18
      %p15 = scmp.ge.s32.totalorder %s14, 4
      %s24 = sphi 0, %s26
      %s27 = sphi 0, %s24
      %s28 = sphi 0, %s27
      %s44 = sphi 0, %s28
      %s48 = sphi 0, %s48
      %s50 = sphi 0, %s48
      %s51 = sphi 0, %s50
      %s65 = sphi 0, %s51
      %s69 = sphi 0, %s69
      %s71 = sphi 0, %s69
      %s72 = sphi 0, %s71
      %s86 = sphi 0, %s72
      %s90 = sphi 0, %s90
      %s92 = sphi 0, %s90
      %s93 = sphi 0, %s92
      %s107 = sphi 0, %s93
      %s111 = sphi 0, %s111
      %s113 = sphi 0, %s111
      %s114 = sphi 0, %s113
      %s128 = sphi 0, %s114
      %s134 = sphi 0, %s136
      %s137 = sphi 0, %s134
      %s138 = sphi 0, %s137
      %s154 = sphi 0, %s138
    $region4: #{tpu_custom_call.1} parent=1 // loop_header_branch
      %17 = sbr.rel (%p15) target = $region8
    $region5: #{tpu_custom_call.1} parent=1 // loop_body
      %s19 = ssub.s32 %s14, 1
      %s20 = ssub.s32 %s14, 2
      %s21 = sadd.s32 %s14, 1
      %s22 = ssub.s32 %s14, %s21
      %p23 = scmp.eq.s32.totalorder %s22, 0
      %s25 = sadd.s32 %s24, 1
      %s26 = scalar_select %p23, %s24, %s25
      %p29 = pneg %p23
      %p30 = scmp.eq.s32.totalorder %s14, 1
      %p31 = por %p29, %p30
      %p32 = scmp.ne.s32.totalorder %s24, %s27
      %p33 = scmp.eq.s32.totalorder %s14, 0
      %p34 = por %p32, %p33
      %p35 = scmp.ne.s32.totalorder %s24, %s27
      %p36 = scmp.eq.s32.totalorder %s19, 1
      %p37 = por %p35, %p36
      %p38 = scmp.ne.s32.totalorder %s27, %s28
      %p39 = scmp.eq.s32.totalorder %s19, 0
      %p40 = por %p38, %p39
      %p41 = scmp.ne.s32.totalorder %s27, %s28
      %p42 = scmp.eq.s32.totalorder %s20, 1
      %p43 = por %p41, %p42
      %p45 = scmp.ne.s32.totalorder %s28, %s44
      %p46 = scmp.eq.s32.totalorder %s20, 0
      %p47 = por %p45, %p46
      %s49 = sadd.s32 %s48, 1
      %p52 = scmp.eq.s32.totalorder %s14, 1
      %p53 = scmp.ne.s32.totalorder %s48, %s50
      %p54 = scmp.eq.s32.totalorder %s14, 0
      %p55 = por %p53, %p54
      %p56 = scmp.ne.s32.totalorder %s48, %s50
      %p57 = scmp.eq.s32.totalorder %s19, 1
      %p58 = por %p56, %p57
      %p59 = scmp.ne.s32.totalorder %s50, %s51
      %p60 = scmp.eq.s32.totalorder %s19, 0
      %p61 = por %p59, %p60
      %p62 = scmp.ne.s32.totalorder %s50, %s51
      %p63 = scmp.eq.s32.totalorder %s20, 1
      %p64 = por %p62, %p63
      %p66 = scmp.ne.s32.totalorder %s51, %s65
      %p67 = scmp.eq.s32.totalorder %s20, 0
      %p68 = por %p66, %p67
      %s70 = sadd.s32 %s69, 1
      %p73 = scmp.eq.s32.totalorder %s14, 1
      %p74 = scmp.ne.s32.totalorder %s69, %s71
      %p75 = scmp.eq.s32.totalorder %s14, 0
      %p76 = por %p74, %p75
      %p77 = scmp.ne.s32.totalorder %s69, %s71
      %p78 = scmp.eq.s32.totalorder %s19, 1
      %p79 = por %p77, %p78
      %p80 = scmp.ne.s32.totalorder %s71, %s72
      %p81 = scmp.eq.s32.totalorder %s19, 0
      %p82 = por %p80, %p81
      %p83 = scmp.ne.s32.totalorder %s71, %s72
      %p84 = scmp.eq.s32.totalorder %s20, 1
      %p85 = por %p83, %p84
      %p87 = scmp.ne.s32.totalorder %s72, %s86
      %p88 = scmp.eq.s32.totalorder %s20, 0
      %p89 = por %p87, %p88
      %s91 = sadd.s32 %s90, 1
      %p94 = scmp.eq.s32.totalorder %s14, 1
      %p95 = scmp.ne.s32.totalorder %s90, %s92
      %p96 = scmp.eq.s32.totalorder %s14, 0
      %p97 = por %p95, %p96
      %p98 = scmp.ne.s32.totalorder %s90, %s92
      %p99 = scmp.eq.s32.totalorder %s19, 1
      %p100 = por %p98, %p99
      %p101 = scmp.ne.s32.totalorder %s92, %s93
      %p102 = scmp.eq.s32.totalorder %s19, 0
      %p103 = por %p101, %p102
      %p104 = scmp.ne.s32.totalorder %s92, %s93
      %p105 = scmp.eq.s32.totalorder %s20, 1
      %p106 = por %p104, %p105
      %p108 = scmp.ne.s32.totalorder %s93, %s107
      %p109 = scmp.eq.s32.totalorder %s20, 0
      %p110 = por %p108, %p109
      %s112 = sadd.s32 %s111, 1
      %p115 = scmp.eq.s32.totalorder %s14, 1
      %p116 = scmp.ne.s32.totalorder %s111, %s113
      %p117 = scmp.eq.s32.totalorder %s14, 0
      %p118 = por %p116, %p117
      %p119 = scmp.ne.s32.totalorder %s111, %s113
      %p120 = scmp.eq.s32.totalorder %s19, 1
      %p121 = por %p119, %p120
      %p122 = scmp.ne.s32.totalorder %s113, %s114
      %p123 = scmp.eq.s32.totalorder %s19, 0
      %p124 = por %p122, %p123
      %p125 = scmp.ne.s32.totalorder %s113, %s114
      %p126 = scmp.eq.s32.totalorder %s20, 1
      %p127 = por %p125, %p126
      %p129 = scmp.ne.s32.totalorder %s114, %s128
      %p130 = scmp.eq.s32.totalorder %s20, 0
      %p131 = por %p129, %p130
      %s132 = ssub.s32 %s14, %s21
      %p133 = scmp.eq.s32.totalorder %s132, 0
      %s135 = sadd.s32 %s134, 1
      %s136 = scalar_select %p133, %s134, %s135
      %p139 = pneg %p133
      %p140 = scmp.eq.s32.totalorder %s14, 1
      %p141 = por %p139, %p140
      %p142 = scmp.ne.s32.totalorder %s134, %s137
      %p143 = scmp.eq.s32.totalorder %s14, 0
      %p144 = por %p142, %p143
      %p145 = scmp.ne.s32.totalorder %s134, %s137
      %p146 = scmp.eq.s32.totalorder %s19, 1
      %p147 = por %p145, %p146
      %p148 = scmp.ne.s32.totalorder %s137, %s138
      %p149 = scmp.eq.s32.totalorder %s19, 0
      %p150 = por %p148, %p149
      %p151 = scmp.ne.s32.totalorder %s137, %s138
      %p152 = scmp.eq.s32.totalorder %s20, 1
      %p153 = por %p151, %p152
      %p155 = scmp.ne.s32.totalorder %s138, %s154
      %p156 = scmp.eq.s32.totalorder %s20, 0
      %p157 = por %p155, %p156
      %p158 = scmp.le.s32.totalorder 1, %s14
      %p159 = scmp.lt.s32.totalorder %s14, 3
      %p160 = pnand %p158, %p159
      %p161 = pneg %p160
      // Predicated region
      $region9: #{tpu_custom_call.1} parent=5 // pred_check
        _
      $region10: #{tpu_custom_call.1} parent=5 // pred_check_branch
        %163 = sbr.rel (%p160) target = $region12
      $region11: #{tpu_custom_call.1} parent=5 // pred_region
        %s164 = ssub.s32 %s14, 1
        // Predicated region
        $region13: #{tpu_custom_call.1} parent=11 // pred_check
          %p165 = pneg %p61
        $region14: #{tpu_custom_call.1} parent=11 // pred_check_branch
          %167 = sbr.rel (%p165) target = $region16
        $region15: #{tpu_custom_call.1} parent=11 // pred_region
          _
        $region16: #{tpu_custom_call.1} parent=11 // pred_fallthru
          _
        // Predicated region
        $region17: #{tpu_custom_call.1} parent=11 // pred_check
          %p168 = pneg %p82
        $region18: #{tpu_custom_call.1} parent=11 // pred_check_branch
          %170 = sbr.rel (%p168) target = $region20
        $region19: #{tpu_custom_call.1} parent=11 // pred_region
          _
        $region20: #{tpu_custom_call.1} parent=11 // pred_fallthru
          _
        // Predicated region
        $region21: #{tpu_custom_call.1} parent=11 // pred_check
          %p171 = pneg %p103
        $region22: #{tpu_custom_call.1} parent=11 // pred_check_branch
          %173 = sbr.rel (%p171) target = $region24
        $region23: #{tpu_custom_call.1} parent=11 // pred_region
          _
        $region24: #{tpu_custom_call.1} parent=11 // pred_fallthru
          _
        // Predicated region
        $region25: #{tpu_custom_call.1} parent=11 // pred_check
          %p174 = pneg %p124
        $region26: #{tpu_custom_call.1} parent=11 // pred_check_branch
          %176 = sbr.rel (%p174) target = $region28
        $region27: #{tpu_custom_call.1} parent=11 // pred_region
          _
        $region28: #{tpu_custom_call.1} parent=11 // pred_fallthru
          _
      $region12: #{tpu_custom_call.1} parent=5 // pred_fallthru
        _
      %p177 = scmp.lt.s32.totalorder %s14, 2
      // Predicated region
      $region29: #{tpu_custom_call.1} parent=5 // pred_check
        %p178 = pneg %p177
      $region30: #{tpu_custom_call.1} parent=5 // pred_check_branch
        %180 = sbr.rel (%p178) target = $region32
      $region31: #{tpu_custom_call.1} parent=5 // pred_region
        // Predicated region
        $region33: #{tpu_custom_call.1} parent=31 // pred_check
          %p181 = pneg %p34
        $region34: #{tpu_custom_call.1} parent=31 // pred_check_branch
          %183 = sbr.rel (%p181) target = $region36
        $region35: #{tpu_custom_call.1} parent=31 // pred_region
          %p184 = scmp.lt.s32.totalorder %s14, 1
          %s185 = scalar_select %p184, %s14, 1
          %s186 = smul.addr %s185, 2
          %s187 = smul.addr %s186, 4
          %s188 = scalar_lea.vmem %s0, %s187
        $region36: #{tpu_custom_call.1} parent=31 // pred_fallthru
          _
      $region32: #{tpu_custom_call.1} parent=5 // pred_fallthru
        _
      %p189 = scmp.le.s32.totalorder 1, %s14
      %p190 = scmp.lt.s32.totalorder %s14, 3
      %p191 = pnand %p189, %p190
      %p192 = pneg %p191
      // Predicated region
      $region37: #{tpu_custom_call.1} parent=5 // pred_check
        _
      $region38: #{tpu_custom_call.1} parent=5 // pred_check_branch
        %194 = sbr.rel (%p191) target = $region40
      $region39: #{tpu_custom_call.1} parent=5 // pred_region
        %s195 = ssub.s32 %s14, 1
        %p196 = scmp.lt.s32.totalorder %s19, 1
        %s197 = scalar_select %p196, %s19, 1
        %s198 = smul.addr %s197, 2
        %s199 = smul.addr %s198, 4
        %s200 = scalar_lea.vmem %s0, %s199
        %p201 = pneg %p40
        %p202 = pneg %p37
        %p203 = pneg %p61
        %p204 = pneg %p58
        %p205 = pneg %p82
        %p206 = pneg %p79
        %p207 = pneg %p103
        %p208 = pneg %p100
        %p209 = pneg %p124
        %p210 = pneg %p121
        %p211 = pneg %p150
        %p212 = pneg %p147
        %s213 = sand.u32 %s137, 1
        %s214 = scalar_lea.sflag [#allocation3], %s213
        %s215 = sand.u32 %s137, 1
        %s216 = smul.addr %s215, 16
        %s217 = scalar_lea.vmem [#allocation2], %s216
        %p218 = scmp.lt.s32.totalorder %s19, 1
        %s219 = scalar_select %p218, %s19, 1
        %s220 = smul.addr %s219, 2
        %s221 = smul.addr %s220, 4
        %s222 = scalar_lea.vmem %s0, %s221
        %v224 = vld [vmem:[%s222] sm:$0xff]
        %v226 = vcombine.high %v224, %v224
        %228 = vst [vmem:[%s217] sm:$0xf] %v224
        %229 = vst [vmem:[%s217 + $0x8] sm:$0xf] %v226
        %v230 = vpack.c.bf16 %v224, %v224
        %v231 = vpack.c.bf16 %v226, %v226
        %v232 = vld [vmem:[%s1] sm:$0xf]
        %v233 = vld [vmem:[%s1 + $0x4] sm:$0xf]
        %v234 = vld [vmem:[%s1 + $0x8] sm:$0xf]
        %v235 = vld [vmem:[%s1 + $0xc] sm:$0xf]
        %v236 = vld [vmem:[%s1 + $0x10] sm:$0xf]
        %v237 = vld [vmem:[%s1 + $0x14] sm:$0xf]
        %v238 = vld [vmem:[%s1 + $0x18] sm:$0xf]
        %v239 = vld [vmem:[%s1 + $0x1c] sm:$0xf]
        %v240 = vld [vmem:[%s1 + $0x20] sm:$0xf]
        %v241 = vld [vmem:[%s1 + $0x24] sm:$0xf]
        %v242 = vld [vmem:[%s1 + $0x28] sm:$0xf]
        %v243 = vld [vmem:[%s1 + $0x2c] sm:$0xf]
        %v244 = vld [vmem:[%s1 + $0x30] sm:$0xf]
        %v245 = vld [vmem:[%s1 + $0x34] sm:$0xf]
        %v246 = vld [vmem:[%s1 + $0x38] sm:$0xf]
        %v247 = vld [vmem:[%s1 + $0x3c] sm:$0xf]
        %v248 = vld [vmem:[%s1 + $0x40] sm:$0xf]
        %v249 = vld [vmem:[%s1 + $0x44] sm:$0xf]
        %v250 = vld [vmem:[%s1 + $0x48] sm:$0xf]
        %v251 = vld [vmem:[%s1 + $0x4c] sm:$0xf]
        %v252 = vld [vmem:[%s1 + $0x50] sm:$0xf]
        %v253 = vld [vmem:[%s1 + $0x54] sm:$0xf]
        %v254 = vld [vmem:[%s1 + $0x58] sm:$0xf]
        %v255 = vld [vmem:[%s1 + $0x5c] sm:$0xf]
        %v256 = vld [vmem:[%s1 + $0x60] sm:$0xf]
        %v257 = vld [vmem:[%s1 + $0x64] sm:$0xf]
        %v258 = vld [vmem:[%s1 + $0x68] sm:$0xf]
        %v259 = vld [vmem:[%s1 + $0x6c] sm:$0xf]
        %v260 = vld [vmem:[%s1 + $0x70] sm:$0xf]
        %v261 = vld [vmem:[%s1 + $0x74] sm:$0xf]
        %v262 = vld [vmem:[%s1 + $0x78] sm:$0xf]
        %v263 = vld [vmem:[%s1 + $0x7c] sm:$0xf]
        %v296 = vunpack.c.l.b16 %v232
        %v297 = vunpack.c.l.b16 %v233
        %v298 = vunpack.c.l.b16 %v234
        %v299 = vunpack.c.l.b16 %v235
        %v300 = vunpack.c.l.b16 %v236
        %v301 = vunpack.c.l.b16 %v237
        %v302 = vunpack.c.l.b16 %v238
        %v303 = vunpack.c.l.b16 %v239
        %v304 = vunpack.c.l.b16 %v240
        %v305 = vunpack.c.l.b16 %v241
        %v306 = vunpack.c.l.b16 %v242
        %v307 = vunpack.c.l.b16 %v243
        %v308 = vunpack.c.l.b16 %v244
        %v309 = vunpack.c.l.b16 %v245
        %v310 = vunpack.c.l.b16 %v246
        %v311 = vunpack.c.l.b16 %v247
        %v312 = vunpack.c.l.b16 %v248
        %v313 = vunpack.c.l.b16 %v249
        %v314 = vunpack.c.l.b16 %v250
        %v315 = vunpack.c.l.b16 %v251
        %v316 = vunpack.c.l.b16 %v252
        %v317 = vunpack.c.l.b16 %v253
        %v318 = vunpack.c.l.b16 %v254
        %v319 = vunpack.c.l.b16 %v255
        %v320 = vunpack.c.l.b16 %v256
        %v321 = vunpack.c.l.b16 %v257
        %v322 = vunpack.c.l.b16 %v258
        %v323 = vunpack.c.l.b16 %v259
        %v324 = vunpack.c.l.b16 %v260
        %v325 = vunpack.c.l.b16 %v261
        %v326 = vunpack.c.l.b16 %v262
        %v327 = vunpack.c.l.b16 %v263
        %v328 = vpack.c.b16 %v297, %v296
        %v329 = vpack.c.b16 %v299, %v298
        %v330 = vpack.c.b16 %v301, %v300
        %v331 = vpack.c.b16 %v303, %v302
        %v332 = vpack.c.b16 %v305, %v304
        %v333 = vpack.c.b16 %v307, %v306
        %v334 = vpack.c.b16 %v309, %v308
        %v335 = vpack.c.b16 %v311, %v310
        %v336 = vpack.c.b16 %v313, %v312
        %v337 = vpack.c.b16 %v315, %v314
        %v338 = vpack.c.b16 %v317, %v316
        %v339 = vpack.c.b16 %v319, %v318
        %v340 = vpack.c.b16 %v321, %v320
        %v341 = vpack.c.b16 %v323, %v322
        %v342 = vpack.c.b16 %v325, %v324
        %v343 = vpack.c.b16 %v327, %v326
        %360 = vmatprep.subr.bf16.mxu0 0
        %361 = vmatpush1.bf16.msra.mxu0 %v328
        %362 = vmatprep.subr.bf16.mxu0 0
        %363 = vmatpush1.bf16.msra.mxu0 %v329
        %364 = vmatprep.subr.bf16.mxu0 0
        %365 = vmatpush1.bf16.msra.mxu0 %v330
        %366 = vmatprep.subr.bf16.mxu0 0
        %367 = vmatpush1.bf16.msra.mxu0 %v331
        %368 = vmatprep.subr.bf16.mxu0 0
        %369 = vmatpush1.bf16.msra.mxu0 %v332
        %370 = vmatprep.subr.bf16.mxu0 0
        %371 = vmatpush1.bf16.msra.mxu0 %v333
        %372 = vmatprep.subr.bf16.mxu0 0
        %373 = vmatpush1.bf16.msra.mxu0 %v334
        %374 = vmatprep.subr.bf16.mxu0 0
        %375 = vmatpush1.bf16.msra.mxu0 %v335
        %376 = vmatprep.subr.bf16.mxu0 0
        %377 = vmatpush1.bf16.msra.mxu0 %v336
        %378 = vmatprep.subr.bf16.mxu0 0
        %379 = vmatpush1.bf16.msra.mxu0 %v337
        %380 = vmatprep.subr.bf16.mxu0 0
        %381 = vmatpush1.bf16.msra.mxu0 %v338
        %382 = vmatprep.subr.bf16.mxu0 0
        %383 = vmatpush1.bf16.msra.mxu0 %v339
        %384 = vmatprep.subr.bf16.mxu0 0
        %385 = vmatpush1.bf16.msra.mxu0 %v340
        %386 = vmatprep.subr.bf16.mxu0 0
        %387 = vmatpush1.bf16.msra.mxu0 %v341
        %388 = vmatprep.subr.bf16.mxu0 0
        %389 = vmatpush1.bf16.msra.mxu0 %v342
        %390 = vmatprep.subr.bf16.mxu0 0
        %391 = vmatpush1.bf16.msra.mxu0 %v343
        %392 = vmatprep.mubr.bf16.mxu0 %v231
        %393 = vmatmul.mubr.bf16.gmra.mrb[0].mxu0 %v230
        %v394 = vpop.f32.mrb[0].mxu0
        %v395 = vadd.f32 0.0, %v394
        %v396 = vpop.f32.mrb[0].mxu0
        %v397 = vpop.f32.mrb[0].mxu0
        %v398 = vpop.f32.mrb[0].mxu0
        %399 = vdwg.mxu0
        %v400 = vpack.c.bf16 %v395, %v395
        %v401 = vld [vmem:[%s3] sm:$0x1]
        %v402 = vld [vmem:[%s4] sm:$0x1]
        %404 = vset.pattern.permute.xlu0 0
        %405 = vperm.xlu0 %404, %v402
        %v406 = vpop.permute.xlu0 %405
        %v408 = vlaneseq
        %v409 = vshrl.u32 %v408, 7
        %v410 = vsub.s32 0, %v409
        %v411 = vrot.slane %v406, %v410
        %vm412 = vcmask 31744
        %v414 = vsel %vm412, %v401, 0
        %vm416 = vcmask 1041408
        %v418 = vsel %vm416, %v400, 0
        %420 = vmatprep.subr.bf16.mxu0 0
        %421 = vmatpush1.bf16.msra.mxu0 %v418
        %422 = vmatprep.subr.bf16.mxu0 0
        %423 = vmatpush1.bf16.msra.mxu0 0
        %424 = vmatprep.subr.bf16.mxu0 0
        %425 = vmatpush1.bf16.msra.mxu0 0
        %426 = vmatprep.subr.bf16.mxu0 0
        %427 = vmatpush1.bf16.msra.mxu0 0
        %428 = vmatprep.subr.bf16.mxu0 0
        %429 = vmatpush1.bf16.msra.mxu0 0
        %430 = vmatprep.subr.bf16.mxu0 0
        %431 = vmatpush1.bf16.msra.mxu0 0
        %432 = vmatprep.subr.bf16.mxu0 0
        %433 = vmatpush1.bf16.msra.mxu0 0
        %434 = vmatprep.subr.bf16.mxu0 0
        %435 = vmatpush1.bf16.msra.mxu0 0
        %436 = vmatprep.subr.bf16.mxu0 0
        %437 = vmatpush1.bf16.msra.mxu0 0
        %438 = vmatprep.subr.bf16.mxu0 0
        %439 = vmatpush1.bf16.msra.mxu0 0
        %440 = vmatprep.subr.bf16.mxu0 0
        %441 = vmatpush1.bf16.msra.mxu0 0
        %442 = vmatprep.subr.bf16.mxu0 0
        %443 = vmatpush1.bf16.msra.mxu0 0
        %444 = vmatprep.subr.bf16.mxu0 0
        %445 = vmatpush1.bf16.msra.mxu0 0
        %446 = vmatprep.subr.bf16.mxu0 0
        %447 = vmatpush1.bf16.msra.mxu0 0
        %448 = vmatprep.subr.bf16.mxu0 0
        %449 = vmatpush1.bf16.msra.mxu0 0
        %450 = vmatprep.subr.bf16.mxu0 0
        %451 = vmatpush1.bf16.msra.mxu0 0
        %452 = vmatprep.mubr.bf16.mxu0 0
        %453 = vmatmul.mubr.bf16.gmra.mrb[0].mxu0 %v414
        %v454 = vpop.f32.mrb[0].mxu0
        %v455 = vadd.f32 %v411, %v454
        %v456 = vpop.f32.mrb[0].mxu0
        %v457 = vpop.f32.mrb[0].mxu0
        %v458 = vpop.f32.mrb[0].mxu0
        %459 = vdwg.mxu0
        %v460 = vmax.f32 %v455, 0.0
        %v461 = vpack.c.bf16 %v460, %v460
        %v462 = vld [vmem:[%s2] sm:$0xff]
        %v463 = vld [vmem:[%s2 + $0x8] sm:$0xff]
        %v464 = vld [vmem:[%s2 + $0x10] sm:$0xff]
        %v465 = vld [vmem:[%s2 + $0x18] sm:$0xff]
        %v466 = vld [vmem:[%s2 + $0x20] sm:$0x33]
        %v472 = vunpack.c.l.b16 %v462
        %v473 = vunpack.c.h.b16 %v462
        %v474 = vunpack.c.l.b16 %v463
        %v475 = vunpack.c.h.b16 %v463
        %v476 = vunpack.c.l.b16 %v464
        %v477 = vunpack.c.h.b16 %v464
        %v478 = vunpack.c.l.b16 %v465
        %v479 = vunpack.c.h.b16 %v465
        %v480 = vunpack.c.l.b16 %v466
        %v481 = vunpack.c.h.b16 %v466
        %v482 = vpack.c.b16 %v474, %v472
        %v483 = vpack.c.b16 %v475, %v473
        %v484 = vpack.c.b16 %v478, %v476
        %v485 = vpack.c.b16 %v479, %v477
        %v486 = vpack.c.b16 %v480, %v480
        %v487 = vpack.c.b16 %v481, %v481
        %vm492 = vcmask 293888
        %v494 = vsel %vm492, %v461, 0
        %v497 = vsel %vm416, %v486, 0
        %v500 = vsel %vm416, %v487, 0
        %502 = vmatprep.subr.bf16.mxu0 %v483
        %503 = vmatpush1.bf16.msra.mxu0 %v482
        %504 = vmatprep.subr.bf16.mxu0 %v485
        %505 = vmatpush1.bf16.msra.mxu0 %v484
        %506 = vmatprep.subr.bf16.mxu0 %v500
        %507 = vmatpush1.bf16.msra.mxu0 %v497
        %508 = vmatprep.subr.bf16.mxu0 0
        %509 = vmatpush1.bf16.msra.mxu0 0
        %510 = vmatprep.subr.bf16.mxu0 0
        %511 = vmatpush1.bf16.msra.mxu0 0
        %512 = vmatprep.subr.bf16.mxu0 0
        %513 = vmatpush1.bf16.msra.mxu0 0
        %514 = vmatprep.subr.bf16.mxu0 0
        %515 = vmatpush1.bf16.msra.mxu0 0
        %516 = vmatprep.subr.bf16.mxu0 0
        %517 = vmatpush1.bf16.msra.mxu0 0
        %518 = vmatprep.subr.bf16.mxu0 0
        %519 = vmatpush1.bf16.msra.mxu0 0
        %520 = vmatprep.subr.bf16.mxu0 0
        %521 = vmatpush1.bf16.msra.mxu0 0
        %522 = vmatprep.subr.bf16.mxu0 0
        %523 = vmatpush1.bf16.msra.mxu0 0
        %524 = vmatprep.subr.bf16.mxu0 0
        %525 = vmatpush1.bf16.msra.mxu0 0
        %526 = vmatprep.subr.bf16.mxu0 0
        %527 = vmatpush1.bf16.msra.mxu0 0
        %528 = vmatprep.subr.bf16.mxu0 0
        %529 = vmatpush1.bf16.msra.mxu0 0
        %530 = vmatprep.subr.bf16.mxu0 0
        %531 = vmatpush1.bf16.msra.mxu0 0
        %532 = vmatprep.subr.bf16.mxu0 0
        %533 = vmatpush1.bf16.msra.mxu0 0
        %534 = vmatprep.mubr.bf16.mxu0 0
        %535 = vmatmul.mubr.bf16.gmra.mrb[0].mxu0 %v494
        %v536 = vpop.f32.mrb[0].mxu0
        %v537 = vadd.f32 0.0, %v536
        %v538 = vpop.f32.mrb[0].mxu0
        %v539 = vadd.f32 0.0, %v538
        %v540 = vpop.f32.mrb[0].mxu0
        %v541 = vpop.f32.mrb[0].mxu0
        %542 = vdwg.mxu0
        %v545 = vcombine.low %v537, %v539
        %v547 = vunpack.c.l.s4 1966171168
        %v548 = vunpack.c.0.s8 %v547
        %v549 = vlaneseq
        %v550 = vshrl.u32 %v549, 7
        %v551 = vsub.s32 %v548, %v550
        %v552 = vrot.slane %v545, %v551
        %v554 = vunpack.c.l.s4 1966171168
        %v555 = vunpack.c.0.s8 %v554
        %v556 = vlaneseq
        %v557 = vshrl.u32 %v556, 7
        %v558 = vsub.s32 %v555, %v557
        %v559 = vrot.slane %v552, %v558
        %v561 = vlaneseq
        %vm562 = vcmp.ge.s32.totalorder %v561, 0
        %vm563 = vcmp.lt.s32.totalorder %v561, 256
        %vm564 = vmand %vm562, %vm563
        %s565 = scalar_lea.vmem %s217, 4 [#allocation2]
        %566 = vst.msk [vmem:[%s565] ss:$8 sm:$0x3] %vm564, %v559
        %567 = vst.msk [vmem:[%s565] ss:$8 sm:$0x0] %vm564, %v559
        %s568 = scalar_lea.vmem %s3, 1
        %v569 = vld [vmem:[%s568] sm:$0x1]
        %s570 = scalar_lea.vmem %s4, 1
        %v571 = vld [vmem:[%s570] sm:$0x1]
        %573 = vset.pattern.permute.xlu0 0
        %574 = vperm.xlu0 %573, %v571
        %v575 = vpop.permute.xlu0 %574
        %v577 = vlaneseq
        %v578 = vshrl.u32 %v577, 7
        %v579 = vsub.s32 0, %v578
        %v580 = vrot.slane %v575, %v579
        %582 = vrot.lane.b32.xlu0 %v400, 92
        %v583 = vpop.permute.xlu0 %582
        %v585 = vsel %vm412, %v569, 0
        %v588 = vsel %vm416, %v583, 0
        %590 = vmatprep.subr.bf16.mxu0 0
        %591 = vmatpush1.bf16.msra.mxu0 %v588
        %592 = vmatprep.subr.bf16.mxu0 0
        %593 = vmatpush1.bf16.msra.mxu0 0
        %594 = vmatprep.subr.bf16.mxu0 0
        %595 = vmatpush1.bf16.msra.mxu0 0
        %596 = vmatprep.subr.bf16.mxu0 0
        %597 = vmatpush1.bf16.msra.mxu0 0
        %598 = vmatprep.subr.bf16.mxu0 0
        %599 = vmatpush1.bf16.msra.mxu0 0
        %600 = vmatprep.subr.bf16.mxu0 0
        %601 = vmatpush1.bf16.msra.mxu0 0
        %602 = vmatprep.subr.bf16.mxu0 0
        %603 = vmatpush1.bf16.msra.mxu0 0
        %604 = vmatprep.subr.bf16.mxu0 0
        %605 = vmatpush1.bf16.msra.mxu0 0
        %606 = vmatprep.subr.bf16.mxu0 0
        %607 = vmatpush1.bf16.msra.mxu0 0
        %608 = vmatprep.subr.bf16.mxu0 0
        %609 = vmatpush1.bf16.msra.mxu0 0
        %610 = vmatprep.subr.bf16.mxu0 0
        %611 = vmatpush1.bf16.msra.mxu0 0
        %612 = vmatprep.subr.bf16.mxu0 0
        %613 = vmatpush1.bf16.msra.mxu0 0
        %614 = vmatprep.subr.bf16.mxu0 0
        %615 = vmatpush1.bf16.msra.mxu0 0
        %616 = vmatprep.subr.bf16.mxu0 0
        %617 = vmatpush1.bf16.msra.mxu0 0
        %618 = vmatprep.subr.bf16.mxu0 0
        %619 = vmatpush1.bf16.msra.mxu0 0
        %620 = vmatprep.subr.bf16.mxu0 0
        %621 = vmatpush1.bf16.msra.mxu0 0
        %622 = vmatprep.mubr.bf16.mxu0 0
        %623 = vmatmul.mubr.bf16.gmra.mrb[0].mxu0 %v585
        %v624 = vpop.f32.mrb[0].mxu0
        %v625 = vadd.f32 %v580, %v624
        %v626 = vpop.f32.mrb[0].mxu0
        %v627 = vpop.f32.mrb[0].mxu0
        %v628 = vpop.f32.mrb[0].mxu0
        %629 = vdwg.mxu0
        %v630 = vmax.f32 %v625, 0.0
        %v631 = vpack.c.bf16 %v630, %v630
        %v632 = vld [vmem:[%s2 + $0x20] sm:$0xcc]
        %v633 = vld [vmem:[%s2 + $0x28] sm:$0x77]
        %v636 = vunpack.c.l.b16 %v632
        %v637 = vunpack.c.h.b16 %v632
        %v638 = vunpack.c.l.b16 %v633
        %v639 = vunpack.c.h.b16 %v633
        %v640 = vpack.c.b16 %v638, %v636
        %v641 = vpack.c.b16 %v639, %v637
        %v642 = vrot.slane %v640, 2
        %v643 = vrot.slane %v641, 2
        %vm644 = vcmask 72704
        %v646 = vsel %vm644, %v631, 0
        %vm648 = vcmask 1043456
        %vm649 = vcmask 1044480
        %v650 = vsel %vm648, 4294967295, 65535
        %v651 = vsel %vm649, %v650, 0
        %v653 = vand.u32 %v642, %v651
        %v656 = vand.u32 %v643, %v651
        %658 = vmatprep.subr.bf16.mxu0 %v656
        %659 = vmatpush1.bf16.msra.mxu0 %v653
        %660 = vmatprep.subr.bf16.mxu0 0
        %661 = vmatpush1.bf16.msra.mxu0 0
        %662 = vmatprep.subr.bf16.mxu0 0
        %663 = vmatpush1.bf16.msra.mxu0 0
        %664 = vmatprep.subr.bf16.mxu0 0
        %665 = vmatpush1.bf16.msra.mxu0 0
        %666 = vmatprep.subr.bf16.mxu0 0
        %667 = vmatpush1.bf16.msra.mxu0 0
        %668 = vmatprep.subr.bf16.mxu0 0
        %669 = vmatpush1.bf16.msra.mxu0 0
        %670 = vmatprep.subr.bf16.mxu0 0
        %671 = vmatpush1.bf16.msra.mxu0 0
        %672 = vmatprep.subr.bf16.mxu0 0
        %673 = vmatpush1.bf16.msra.mxu0 0
        %674 = vmatprep.subr.bf16.mxu0 0
        %675 = vmatpush1.bf16.msra.mxu0 0
        %676 = vmatprep.subr.bf16.mxu0 0
        %677 = vmatpush1.bf16.msra.mxu0 0
        %678 = vmatprep.subr.bf16.mxu0 0
        %679 = vmatpush1.bf16.msra.mxu0 0
        %680 = vmatprep.subr.bf16.mxu0 0
        %681 = vmatpush1.bf16.msra.mxu0 0
        %682 = vmatprep.subr.bf16.mxu0 0
        %683 = vmatpush1.bf16.msra.mxu0 0
        %684 = vmatprep.subr.bf16.mxu0 0
        %685 = vmatpush1.bf16.msra.mxu0 0
        %686 = vmatprep.subr.bf16.mxu0 0
        %687 = vmatpush1.bf16.msra.mxu0 0
        %688 = vmatprep.subr.bf16.mxu0 0
        %689 = vmatpush1.bf16.msra.mxu0 0
        %690 = vmatprep.mubr.bf16.mxu0 0
        %691 = vmatmul.mubr.bf16.gmra.mrb[0].mxu0 %v646
        %v692 = vpop.f32.mrb[0].mxu0
        %v693 = vadd.f32 0.0, %v692
        %v694 = vpop.f32.mrb[0].mxu0
        %v695 = vadd.f32 0.0, %v694
        %v696 = vpop.f32.mrb[0].mxu0
        %v697 = vpop.f32.mrb[0].mxu0
        %698 = vdwg.mxu0
        %v701 = vcombine.low %v693, %v695
        %v703 = vunpack.c.l.s4 1966171168
        %v704 = vunpack.c.0.s8 %v703
        %v705 = vlaneseq
        %v706 = vshrl.u32 %v705, 7
        %v707 = vsub.s32 %v704, %v706
        %v708 = vrot.slane %v701, %v707
        %v710 = vunpack.c.l.s4 1966171168
        %v711 = vunpack.c.0.s8 %v710
        %v712 = vlaneseq
        %v713 = vshrl.u32 %v712, 7
        %v714 = vsub.s32 %v711, %v713
        %v715 = vrot.slane %v708, %v714
        %s717 = scalar_lea.vmem %s217, 5 [#allocation2]
        %718 = vst.msk [vmem:[%s717] ss:$8 sm:$0x3] %vm564, %v715
        %719 = vst.msk [vmem:[%s717] ss:$8 sm:$0x0] %vm564, %v715
        %s720 = scalar_lea.vmem %s3, 2
        %v721 = vld [vmem:[%s720] sm:$0x1]
        %s722 = scalar_lea.vmem %s4, 2
        %v723 = vld [vmem:[%s722] sm:$0x1]
        %725 = vset.pattern.permute.xlu0 0
        %726 = vperm.xlu0 %725, %v723
        %v727 = vpop.permute.xlu0 %726
        %v729 = vlaneseq
        %v730 = vshrl.u32 %v729, 7
        %v731 = vsub.s32 0, %v730
        %v732 = vrot.slane %v727, %v731
        %733 = vrot.lane.b32.xlu0 %v400, 83
        %v734 = vpop.permute.xlu0 %733
        %v736 = vsel %vm412, %v721, 0
        %v739 = vsel %vm416, %v734, 0
        %741 = vmatprep.subr.bf16.mxu0 0
        %742 = vmatpush1.bf16.msra.mxu0 %v739
        %743 = vmatprep.subr.bf16.mxu0 0
        %744 = vmatpush1.bf16.msra.mxu0 0
        %745 = vmatprep.subr.bf16.mxu0 0
        %746 = vmatpush1.bf16.msra.mxu0 0
        %747 = vmatprep.subr.bf16.mxu0 0
        %748 = vmatpush1.bf16.msra.mxu0 0
        %749 = vmatprep.subr.bf16.mxu0 0
        %750 = vmatpush1.bf16.msra.mxu0 0
        %751 = vmatprep.subr.bf16.mxu0 0
        %752 = vmatpush1.bf16.msra.mxu0 0
        %753 = vmatprep.subr.bf16.mxu0 0
        %754 = vmatpush1.bf16.msra.mxu0 0
        %755 = vmatprep.subr.bf16.mxu0 0
        %756 = vmatpush1.bf16.msra.mxu0 0
        %757 = vmatprep.subr.bf16.mxu0 0
        %758 = vmatpush1.bf16.msra.mxu0 0
        %759 = vmatprep.subr.bf16.mxu0 0
        %760 = vmatpush1.bf16.msra.mxu0 0
        %761 = vmatprep.subr.bf16.mxu0 0
        %762 = vmatpush1.bf16.msra.mxu0 0
        %763 = vmatprep.subr.bf16.mxu0 0
        %764 = vmatpush1.bf16.msra.mxu0 0
        %765 = vmatprep.subr.bf16.mxu0 0
        %766 = vmatpush1.bf16.msra.mxu0 0
        %767 = vmatprep.subr.bf16.mxu0 0
        %768 = vmatpush1.bf16.msra.mxu0 0
        %769 = vmatprep.subr.bf16.mxu0 0
        %770 = vmatpush1.bf16.msra.mxu0 0
        %771 = vmatprep.subr.bf16.mxu0 0
        %772 = vmatpush1.bf16.msra.mxu0 0
        %773 = vmatprep.mubr.bf16.mxu0 0
        %774 = vmatmul.mubr.bf16.gmra.mrb[0].mxu0 %v736
        %v775 = vpop.f32.mrb[0].mxu0
        %v776 = vadd.f32 %v732, %v775
        %v777 = vpop.f32.mrb[0].mxu0
        %v778 = vpop.f32.mrb[0].mxu0
        %v779 = vpop.f32.mrb[0].mxu0
        %780 = vdwg.mxu0
        %v781 = vmax.f32 %v776, 0.0
        %v782 = vpack.c.bf16 %v781, %v781
        %v783 = vld [vmem:[%s2 + $0x28] sm:$0xcc]
        %v784 = vld [vmem:[%s2 + $0x30] sm:$0x11]
        %v787 = vunpack.c.l.b16 %v783
        %v788 = vunpack.c.h.b16 %v783
        %v789 = vunpack.c.l.b16 %v784
        %v790 = vunpack.c.h.b16 %v784
        %v791 = vpack.c.b16 %v789, %v787
        %v792 = vpack.c.b16 %v790, %v788
        %v794 = vshrl.u32 %v791, 16
        %v796 = vrot.slane %v794, 2
        %v797 = vshll.u32 %v791, 16
        %v799 = vrot.slane %v797, 3
        %v800 = vor.u32 %v796, %v799
        %v802 = vshrl.u32 %v792, 16
        %v804 = vrot.slane %v802, 2
        %v805 = vshll.u32 %v792, 16
        %v807 = vrot.slane %v805, 3
        %v808 = vor.u32 %v804, %v807
        %v810 = vsel %vm412, %v782, 0
        %v813 = vsel %vm416, %v800, 0
        %v816 = vsel %vm416, %v808, 0
        %818 = vmatprep.subr.bf16.mxu0 %v816
        %819 = vmatpush1.bf16.msra.mxu0 %v813
        %820 = vmatprep.subr.bf16.mxu0 0
        %821 = vmatpush1.bf16.msra.mxu0 0
        %822 = vmatprep.subr.bf16.mxu0 0
        %823 = vmatpush1.bf16.msra.mxu0 0
        %824 = vmatprep.subr.bf16.mxu0 0
        %825 = vmatpush1.bf16.msra.mxu0 0
        %826 = vmatprep.subr.bf16.mxu0 0
        %827 = vmatpush1.bf16.msra.mxu0 0
        %828 = vmatprep.subr.bf16.mxu0 0
        %829 = vmatpush1.bf16.msra.mxu0 0
        %830 = vmatprep.subr.bf16.mxu0 0
        %831 = vmatpush1.bf16.msra.mxu0 0
        %832 = vmatprep.subr.bf16.mxu0 0
        %833 = vmatpush1.bf16.msra.mxu0 0
        %834 = vmatprep.subr.bf16.mxu0 0
        %835 = vmatpush1.bf16.msra.mxu0 0
        %836 = vmatprep.subr.bf16.mxu0 0
        %837 = vmatpush1.bf16.msra.mxu0 0
        %838 = vmatprep.subr.bf16.mxu0 0
        %839 = vmatpush1.bf16.msra.mxu0 0
        %840 = vmatprep.subr.bf16.mxu0 0
        %841 = vmatpush1.bf16.msra.mxu0 0
        %842 = vmatprep.subr.bf16.mxu0 0
        %843 = vmatpush1.bf16.msra.mxu0 0
        %844 = vmatprep.subr.bf16.mxu0 0
        %845 = vmatpush1.bf16.msra.mxu0 0
        %846 = vmatprep.subr.bf16.mxu0 0
        %847 = vmatpush1.bf16.msra.mxu0 0
        %848 = vmatprep.subr.bf16.mxu0 0
        %849 = vmatpush1.bf16.msra.mxu0 0
        %850 = vmatprep.mubr.bf16.mxu0 0
        %851 = vmatmul.mubr.bf16.gmra.mrb[0].mxu0 %v810
        %v852 = vpop.f32.mrb[0].mxu0
        %v853 = vadd.f32 0.0, %v852
        %v854 = vpop.f32.mrb[0].mxu0
        %v855 = vadd.f32 0.0, %v854
        %v856 = vpop.f32.mrb[0].mxu0
        %v857 = vpop.f32.mrb[0].mxu0
        %858 = vdwg.mxu0
        %v861 = vcombine.low %v853, %v855
        %v863 = vunpack.c.l.s4 1966171168
        %v864 = vunpack.c.0.s8 %v863
        %v865 = vlaneseq
        %v866 = vshrl.u32 %v865, 7
        %v867 = vsub.s32 %v864, %v866
        %v868 = vrot.slane %v861, %v867
        %v870 = vunpack.c.l.s4 1966171168
        %v871 = vunpack.c.0.s8 %v870
        %v872 = vlaneseq
        %v873 = vshrl.u32 %v872, 7
        %v874 = vsub.s32 %v871, %v873
        %v875 = vrot.slane %v868, %v874
        %s877 = scalar_lea.vmem %s217, 6 [#allocation2]
        %878 = vst.msk [vmem:[%s877] ss:$8 sm:$0x3] %vm564, %v875
        %879 = vst.msk [vmem:[%s877] ss:$8 sm:$0x0] %vm564, %v875
        %s880 = scalar_lea.vmem %s3, 3
        %v881 = vld [vmem:[%s880] sm:$0x1]
        %s882 = scalar_lea.vmem %s4, 3
        %v883 = vld [vmem:[%s882] sm:$0x1]
        %v884 = vsel %vm648, %v224, 0.0
        %v885 = vsel %vm648, %v226, 0.0
        %v886 = vadd.f32 %v884, %v885
        %887 = vadd.xlane.f32.xlu0 %v886
        %v888 = vpop.xlane.xlu0 %887
        %v889 = vrcp.pop 256.0
        %v890 = vmul.f32 %v888, %v889
        %v891 = vunpack.c.l.bf16 %v881
        %v893 = vsel %vm412, %v891, 0
        %v896 = vsel %vm648, %v890, 0
        %898 = vmatprep.subr.mxu0 0.0
        %899 = vmatpush1.msra.mxu0 %v896
        %900 = vmatprep.subr.mxu0 0.0
        %901 = vmatpush1.msra.mxu0 0.0
        %902 = vmatprep.subr.mxu0 0.0
        %903 = vmatpush1.msra.mxu0 0.0
        %904 = vmatprep.subr.mxu0 0.0
        %905 = vmatpush1.msra.mxu0 0.0
        %906 = vmatprep.subr.mxu0 0.0
        %907 = vmatpush1.msra.mxu0 0.0
        %908 = vmatprep.subr.mxu0 0.0
        %909 = vmatpush1.msra.mxu0 0.0
        %910 = vmatprep.subr.mxu0 0.0
        %911 = vmatpush1.msra.mxu0 0.0
        %912 = vmatprep.subr.mxu0 0.0
        %913 = vmatpush1.msra.mxu0 0.0
        %914 = vmatprep.subr.mxu0 0.0
        %915 = vmatpush1.msra.mxu0 0.0
        %916 = vmatprep.subr.mxu0 0.0
        %917 = vmatpush1.msra.mxu0 0.0
        %918 = vmatprep.subr.mxu0 0.0
        %919 = vmatpush1.msra.mxu0 0.0
        %920 = vmatprep.subr.mxu0 0.0
        %921 = vmatpush1.msra.mxu0 0.0
        %922 = vmatprep.subr.mxu0 0.0
        %923 = vmatpush1.msra.mxu0 0.0
        %924 = vmatprep.subr.mxu0 0.0
        %925 = vmatpush1.msra.mxu0 0.0
        %926 = vmatprep.subr.mxu0 0.0
        %927 = vmatpush1.msra.mxu0 0.0
        %928 = vmatprep.subr.mxu0 0.0
        %929 = vmatpush1.msra.mxu0 0.0
        %930 = vmatprep.subr.mxu0 0.0
        %931 = vmatpush1.msra.mxu0 0.0
        %932 = vmatprep.subr.mxu0 0.0
        %933 = vmatpush1.msra.mxu0 0.0
        %934 = vmatprep.subr.mxu0 0.0
        %935 = vmatpush1.msra.mxu0 0.0
        %936 = vmatprep.subr.mxu0 0.0
        %937 = vmatpush1.msra.mxu0 0.0
        %938 = vmatprep.subr.mxu0 0.0
        %939 = vmatpush1.msra.mxu0 0.0
        %940 = vmatprep.subr.mxu0 0.0
        %941 = vmatpush1.msra.mxu0 0.0
        %942 = vmatprep.subr.mxu0 0.0
        %943 = vmatpush1.msra.mxu0 0.0
        %944 = vmatprep.subr.mxu0 0.0
        %945 = vmatpush1.msra.mxu0 0.0
        %946 = vmatprep.subr.mxu0 0.0
        %947 = vmatpush1.msra.mxu0 0.0
        %948 = vmatprep.subr.mxu0 0.0
        %949 = vmatpush1.msra.mxu0 0.0
        %950 = vmatprep.subr.mxu0 0.0
        %951 = vmatpush1.msra.mxu0 0.0
        %952 = vmatprep.subr.mxu0 0.0
        %953 = vmatpush1.msra.mxu0 0.0
        %954 = vmatprep.subr.mxu0 0.0
        %955 = vmatpush1.msra.mxu0 0.0
        %956 = vmatprep.subr.mxu0 0.0
        %957 = vmatpush1.msra.mxu0 0.0
        %958 = vmatprep.subr.mxu0 0.0
        %959 = vmatpush1.msra.mxu0 0.0
        %960 = vmatprep.subr.mxu0 0.0
        %961 = vmatpush1.msra.mxu0 0.0
        %962 = vmatprep.mubr.f32.mxu0 0.0
        %963 = vmatmul.mubr.f32.gmra.mrb[0].mxu0 %v893
        %v964 = vpop.f32.mrb[0].mxu0
        %v965 = vadd.f32 %v883, %v964
        %v966 = vpop.f32.mrb[0].mxu0
        %967 = vdwg.mxu0
        %v968 = vmax.f32 %v965, 0.0
        %970 = vset.pattern.permute.xlu0 0
        %971 = vperm.xlu0 %970, %v968
        %v972 = vpop.permute.xlu0 %971
        %v973 = vlaneseq
        %v974 = vshrl.u32 %v973, 7
        %v975 = vsub.s32 0, %v974
        %v976 = vrot.slane %v972, %v975
        %s978 = scalar_lea.vmem %s217, 7 [#allocation2]
        %979 = vst.msk [vmem:[%s978] ss:$8 sm:$0x3] %vm564, %v976
        %980 = vst.msk [vmem:[%s978] ss:$8 sm:$0x0] %vm564, %v976
        %s981 = sand.u32 %s137, 1
        %s982 = scalar_lea.sflag [#allocation3], %s981
        %s983 = sand.u32 %s137, 1
        %s984 = smul.addr %s983, 16
        %s985 = scalar_lea.vmem [#allocation2], %s984
        // Predicated region
        $region41: #{tpu_custom_call.1} parent=39 // pred_check
          %p986 = pneg %p147
        $region42: #{tpu_custom_call.1} parent=39 // pred_check_branch
          %988 = sbr.rel (%p986) target = $region44
        $region43: #{tpu_custom_call.1} parent=39 // pred_region
          %s990 = ssub.s32 256, 256
          %991 = vsyncadd %s982, %s990
          %s992 = smul.addr %s19, 2
          %s993 = smul.addr %s992, 128
          %s994 = scalar_lea.hbm %s5, %s993
          %s996 = sshll.u32 %s985, 4
          %s997 = int_to_ptr.vmem [resolvable:$true] %s996
          %999 = dma.vmem_to_hbm [thread:$0]  %s997, 256, %s994, %s982
        $region44: #{tpu_custom_call.1} parent=39 // pred_fallthru
          _
      $region40: #{tpu_custom_call.1} parent=5 // pred_fallthru
        _
      %p1000 = scmp.le.s32.totalorder 2, %s14
      // Predicated region
      $region45: #{tpu_custom_call.1} parent=5 // pred_check
        %p1001 = pneg %p1000
      $region46: #{tpu_custom_call.1} parent=5 // pred_check_branch
        %1003 = sbr.rel (%p1001) target = $region48
      $region47: #{tpu_custom_call.1} parent=5 // pred_region
        %s1004 = ssub.s32 %s14, 2
        // Predicated region
        $region49: #{tpu_custom_call.1} parent=47 // pred_check
          %p1005 = pneg %p153
        $region50: #{tpu_custom_call.1} parent=47 // pred_check_branch
          %1007 = sbr.rel (%p1005) target = $region52
        $region51: #{tpu_custom_call.1} parent=47 // pred_region
          %s1008 = sand.u32 %s138, 1
          %s1009 = scalar_lea.sflag [#allocation3], %s1008
          %s1010 = sand.u32 %s138, 1
          %s1011 = smul.addr %s1010, 16
          %s1012 = scalar_lea.vmem [#allocation2], %s1011
          %1013 = dma.done %s1009, 256
        $region52: #{tpu_custom_call.1} parent=47 // pred_fallthru
          _
      $region48: #{tpu_custom_call.1} parent=5 // pred_fallthru
        _
    $region6: #{tpu_custom_call.1} parent=1 // loop_footer
      %s18 = sadd.s32 1, %s14
    $region7: #{tpu_custom_call.1} parent=1 // loop_footer_branch
      %13 = sbr.rel target = $region3
    $region8: #{tpu_custom_call.1} parent=1 // loop_exit
      _
    %1014 = vsyncpa [#allocation3], 1
    %s1015 = scalar_lea.sflag [#allocation3], 1
    %1016 = vsyncpa %s1015, 1

</llo_original>
